<compile_context>
chip_gen: v7x
topology: tpu7x:2x2x1
jax: 0.10.0
libtpu: 0.0.40
codegen_flags: <defaults>
</compile_context>

<pallas_src>
import jax
import jax.numpy as jnp
from jax.experimental import pallas as pl
from jax.experimental.pallas import tpu as pltpu


def _round_up(x, m):
    return ((x + m - 1) // m) * m


def _vmem_capacity_bytes():
    try:
        return int(pltpu.get_tpu_info().vmem_capacity_bytes)
    except Exception:
        return 64 << 20  # conservative: v7x per-TensorCore VMEM


def _proj_kernel(x_ref, w_ref, b_ref, o_ref):
    # x_ref: (TM, K) streamed activation tile; w_ref: (K, TN) resident weight;
    # b_ref: (1, TN) resident bias; o_ref: (TM, TN) output tile.
    acc = jnp.dot(x_ref[...], w_ref[...], preferred_element_type=jnp.float32)
    o_ref[...] = (acc + b_ref[...].astype(jnp.float32)).astype(o_ref.dtype)


def _proj_kernel_ksplit(x_ref, w_ref, b_ref, o_ref, acc_ref):
    # Same matmul with a K-reduction grid axis (axis 2, innermost, "arbitrary").
    k = pl.program_id(2)

    @pl.when(k == 0)
    def _():
        acc_ref[...] = jnp.zeros_like(acc_ref)

    acc_ref[...] += jnp.dot(x_ref[...], w_ref[...],
                            preferred_element_type=jnp.float32)

    @pl.when(k == pl.num_programs(2) - 1)
    def _():
        o_ref[...] = (acc_ref[...] + b_ref[...].astype(jnp.float32)
                      ).astype(o_ref.dtype)


def _block_vmem_bytes(tm, tk, tn, nk, in_bytes, bias_bytes, out_bytes, x_bufs=2):
    """Approximate VMEM footprint of one pipelined grid step."""
    total = x_bufs * tm * tk * in_bytes       # streamed activation tile
    total += 2 * tk * tn * in_bytes           # weight tile (double-buffered)
    total += 2 * tn * bias_bytes              # bias tile
    total += 2 * tm * tn * out_bytes          # output tile
    if nk > 1:
        total += tm * tn * 4                  # f32 accumulator scratch
    return total


def _select_tiles(M, K_pad, E_pad, in_bytes, bias_bytes, out_bytes, budget, sub):
    """Pick (TM, TK, TN): weight residency first, no K split second, big TM last."""
    if M <= 512:
        tm_cands = [_round_up(max(M, sub), sub)]
    else:
        tm_cands = [512, 256, 128]
    tn_cands = [E_pad] + [t for t in (512, 256, 128)
                          if t < E_pad and E_pad % t == 0]
    tk_cands = [K_pad] + [t for t in (2048, 1024, 512, 256, 128)
                          if t < K_pad and K_pad % t == 0]

    for tn in tn_cands:                  # prefer a single resident weight tile
        for tk in tk_cands:              # prefer no K-reduction axis
            nk = K_pad // tk
            feas = [tm for tm in tm_cands
                    if _block_vmem_bytes(tm, tk, tn, nk, in_bytes, bias_bytes,
                                         out_bytes) <= budget]
            if feas:
                # Minimize M-padding waste; ties -> largest tile.
                tm = min(feas, key=lambda t: (_round_up(M, t), -t))
                return tm, tk, tn
    # Pathologically small budget: smallest aligned tiles; explicit vmem limit
    # below still covers them.
    return tm_cands[-1], tk_cands[-1], tn_cands[-1]


def patch_embedding_projection(x, weight, bias, patch_size, *,
                               mxu_dtype=None, out_dtype=None):
    """Equivalent of Patch_Embedding_Projection.forward.

    Args:
      x: (B, C, H, W) image, NCHW like PyTorch.
      weight: (E, K) linear weight, K = C * patch_size**2 (PyTorch layout).
      bias: (E,) linear bias.
      patch_size: patch size p (stride == p, no padding).
      mxu_dtype: optional dtype (e.g. jnp.bfloat16) for the MXU operands;
        accumulation and bias add stay f32. None -> keep input dtype.
      out_dtype: output dtype; None -> x.dtype.

    Returns:
      (B, L, E) patch embeddings, L = (H//p) * (W//p).
    """
    B, C, H, W = x.shape
    p = patch_size
    assert H % p == 0 and W % p == 0
    nh, nw = H // p, W // p
    L = nh * nw
    K = C * p * p
    E = weight.shape[0]
    out_dtype = x.dtype if out_dtype is None else out_dtype

    # im2col (nn.Unfold kernel=p, stride=p, pad=0) folded with transpose(1, 2):
    #   (B, C, H, W) -> (B, nh, nw, C, p, p) -> (M, K); feature order
    #   c*p*p + kh*p + kw matches torch.nn.Unfold.
    # TODO(synk): stays as XLA glue (no clean in-kernel NCHW gather without
    # per-step transposes).
    patches = x.reshape(B, C, nh, p, nw, p)
    patches = jnp.transpose(patches, (0, 2, 4, 1, 3, 5))
    M = B * L
    patches2d = patches.reshape(M, K)

    w_t = weight.T                      # (K, E)
    b2d = bias.reshape(1, E)            # (1, E), stays in its own (f32) dtype

    compute_dtype = jnp.dtype(mxu_dtype) if mxu_dtype is not None else jnp.dtype(x.dtype)
    if mxu_dtype is not None:
        patches2d = patches2d.astype(compute_dtype)
        w_t = w_t.astype(compute_dtype)
    in_bytes = compute_dtype.itemsize
    bias_bytes = jnp.dtype(b2d.dtype).itemsize
    out_bytes = jnp.dtype(out_dtype).itemsize
    sub = max(8, 32 // in_bytes)        # sublane multiple: 8 f32 / 16 bf16

    # Lane-dense padding: K and E to multiples of 128 (zero pads are exact).
    K_pad = _round_up(max(K, 128), 128)
    E_pad = _round_up(max(E, 128), 128)

    # Per-generation VMEM budget; set the limit explicitly (scoped defaults are
    # 16/32/32 MiB on v5e/v6e/v7x vs 128/128/64 MiB physical).
    cap = _vmem_capacity_bytes()
    budget = int(cap * 0.70)
    TM, TK, TN = _select_tiles(M, K_pad, E_pad, in_bytes, bias_bytes, out_bytes,
                               budget, sub)
    M_pad = _round_up(M, TM)
    nj, ni, nk = E_pad // TN, M_pad // TM, K_pad // TK

    # Pad operands (zero pads contribute nothing to the dot; sliced off below).
    if M_pad != M or K_pad != K:
        patches2d = jnp.pad(patches2d, ((0, M_pad - M), (0, K_pad - K)))
    if K_pad != K or E_pad != E:
        w_t = jnp.pad(w_t, ((0, K_pad - K), (0, E_pad - E)))
    if E_pad != E:
        b2d = jnp.pad(b2d, ((0, 0), (0, E_pad - E)))

    # Optional 3-deep buffering of the streamed activation tile when the M axis
    # is long and there is VMEM headroom.
    x_bufs = 2
    if ni >= 4 and _block_vmem_bytes(TM, TK, TN, nk, in_bytes, bias_bytes,
                                     out_bytes, x_bufs=3) <= budget:
        x_bufs = 3
    usage = _block_vmem_bytes(TM, TK, TN, nk, in_bytes, bias_bytes, out_bytes,
                              x_bufs=x_bufs)
    vmem_limit = min(int(cap * 0.85), max(usage + (16 << 20), 32 << 20))
    x_spec_kwargs = dict(pipeline_mode=pl.Buffered(3)) if x_bufs == 3 else {}

    if nk == 1:
        # Grid (E tiles, M tiles), M innermost: weight/bias block indices are
        # constant across consecutive steps -> resident in VMEM, only the
        # activation tile streams.
        grid = (nj, ni)
        in_specs = [
            pl.BlockSpec((TM, K_pad), lambda j, i: (i, 0), **x_spec_kwargs),
            pl.BlockSpec((K_pad, TN), lambda j, i: (0, j)),
            pl.BlockSpec((1, TN), lambda j, i: (0, j)),
        ]
        out_spec = pl.BlockSpec((TM, TN), lambda j, i: (i, j))
        scratch = []
        kernel = _proj_kernel
        dims = ("parallel", "parallel")
    else:
        # K split (very large K): reduction axis innermost + f32 accumulator.
        grid = (nj, ni, nk)
        in_specs = [
            pl.BlockSpec((TM, TK), lambda j, i, k: (i, k), **x_spec_kwargs),
            pl.BlockSpec((TK, TN), lambda j, i, k: (k, j)),
            pl.BlockSpec((1, TN), lambda j, i, k: (0, j)),
        ]
        out_spec = pl.BlockSpec((TM, TN), lambda j, i, k: (i, j))
        scratch = [pltpu.VMEM((TM, TN), jnp.float32)]
        kernel = _proj_kernel_ksplit
        dims = ("parallel", "parallel", "arbitrary")

    # Honest traffic estimate (includes re-streams when tiled/split).
    x_reads = nj                        # activations re-read once per E tile
    w_reads = 1 if nk == 1 else ni      # weight resident only without K split
    cost = pl.CostEstimate(
        flops=2 * M_pad * K_pad * E_pad,
        transcendentals=0,
        bytes_accessed=int(x_reads * M_pad * K_pad * in_bytes
                           + w_reads * K_pad * E_pad * in_bytes
                           + nj * E_pad * bias_bytes
                           + M_pad * E_pad * out_bytes),
    )

    out2d = pl.pallas_call(
        kernel,
        out_shape=jax.ShapeDtypeStruct((M_pad, E_pad), out_dtype),
        grid_spec=pltpu.PrefetchScalarGridSpec(
            num_scalar_prefetch=0,
            grid=grid,
            in_specs=in_specs,
            out_specs=out_spec,
            scratch_shapes=scratch,
        ),
        compiler_params=pltpu.CompilerParams(
            dimension_semantics=dims,
            vmem_limit_bytes=int(vmem_limit),
            # Let XLA try to fuse the im2col producer into the activation DMA
            # (may still materialize the transpose in HBM; see TODO above).
            allow_input_fusion=[True, False, False],
        ),
        cost_estimate=cost,
    )(patches2d, w_t, b2d)

    return out2d[:M, :E].reshape(B, L, E)


def _reference(x, weight, bias, patch_size):
    """Pure-JAX reference of the PyTorch forward (for correctness check)."""
    B, C, H, W = x.shape
    p = patch_size
    nh, nw = H // p, W // p
    patches = x.reshape(B, C, nh, p, nw, p)
    patches = jnp.transpose(patches, (0, 2, 4, 1, 3, 5)).reshape(
        B, nh * nw, C * p * p)
    return patches @ weight.T + bias


if __name__ == "__main__":
    k1, k2, k3, k4, k5, k6 = jax.random.split(jax.random.PRNGKey(0), 6)

    # --- Test 1: f32 path, small module-consistent shapes. ---
    B, C, H, W, p, E = 2, 4, 16, 16, 4, 32
    K = C * p * p
    x = jax.random.normal(k1, (B, C, H, W), dtype=jnp.float32)
    bound = 1.0 / (K ** 0.5)
    weight = jax.random.uniform(k2, (E, K), jnp.float32, -bound, bound)
    bias = jax.random.uniform(k3, (E,), jnp.float32, -bound, bound)

    out = jax.block_until_ready(patch_embedding_projection(x, weight, bias, p))
    ref = _reference(x, weight, bias, p)
    assert out.shape == (B, (H // p) * (W // p), E)
    assert jnp.allclose(out, ref, atol=1e-5, rtol=1e-5)

    # --- Test 2: exercises K padding (48 -> 128), E padding (200 -> 256) and
    # the bf16 MXU-operand path (f32 accumulation; looser tolerance). ---
    B2, C2, H2, W2, p2, E2 = 2, 3, 32, 32, 4, 200
    K2 = C2 * p2 * p2
    x2 = jax.random.normal(k4, (B2, C2, H2, W2), dtype=jnp.float32)
    bound2 = 1.0 / (K2 ** 0.5)
    weight2 = jax.random.uniform(k5, (E2, K2), jnp.float32, -bound2, bound2)
    bias2 = jax.random.uniform(k6, (E2,), jnp.float32, -bound2, bound2)

    out2 = jax.block_until_ready(
        patch_embedding_projection(x2, weight2, bias2, p2,
                                   mxu_dtype=jnp.bfloat16))
    ref2 = _reference(x2, weight2, bias2, p2)
    assert out2.shape == (B2, (H2 // p2) * (W2 // p2), E2)
    assert jnp.allclose(out2, ref2, atol=2e-2, rtol=2e-2)

    print("KERNEL_OK")
</pallas_src>

<mosaic_0001>
module attributes {stable_mosaic.version = 11 : i64} {
  func.func @_proj_kernel(%arg0: i32, %arg1: i32, %arg2: memref<32x128xf32, #tpu.memory_space<vmem>>, %arg3: memref<128x128xf32, #tpu.memory_space<vmem>>, %arg4: memref<1x128xf32, #tpu.memory_space<vmem>>, %arg5: memref<32x128xf32, #tpu.memory_space<vmem>>) attributes {dimension_semantics = [#tpu.dimension_semantics<parallel>, #tpu.dimension_semantics<parallel>], iteration_bounds = array<i64: 1, 1>, scalar_prefetch = 0 : i64, scratch_operands = 0 : i64, tpu.core_type = #tpu.core_type<tc>, window_params = [{transform_indices = @transform_0, window_bounds = array<i64: 32, 128>}, {transform_indices = @transform_1, window_bounds = array<i64: 128, 128>}, {transform_indices = @transform_2, window_bounds = array<i64: 1, 128>}, {transform_indices = @transform_3, window_bounds = array<i64: 32, 128>}]} {
    %c0 = arith.constant 0 : index
    %c0_0 = arith.constant 0 : index
    %0 = vector.load %arg2[%c0, %c0_0] : memref<32x128xf32, #tpu.memory_space<vmem>>, vector<32x128xf32>
    %c0_1 = arith.constant 0 : index
    %c0_2 = arith.constant 0 : index
    %1 = vector.load %arg3[%c0_1, %c0_2] : memref<128x128xf32, #tpu.memory_space<vmem>>, vector<128x128xf32>
    %cst = arith.constant dense<0.000000e+00> : vector<32x128xf32>
    %2 = tpu.matmul %0, %1, %cst {dimension_numbers = #tpu.dot_dimension_numbers<[1], [0], [0], [1], [0, 0, 1, 1], [], []>} : vector<32x128xf32>, vector<128x128xf32>, vector<32x128xf32> -> vector<32x128xf32>
    %c0_3 = arith.constant 0 : index
    %c0_4 = arith.constant 0 : index
    %3 = vector.load %arg4[%c0_3, %c0_4] : memref<1x128xf32, #tpu.memory_space<vmem>>, vector<1x128xf32>
    %4 = vector.broadcast %3 : vector<1x128xf32> to vector<32x128xf32>
    %5 = arith.addf %2, %4 : vector<32x128xf32>
    %c0_5 = arith.constant 0 : index
    %c0_6 = arith.constant 0 : index
    %6 = vector.load %arg5[%c0_5, %c0_6] : memref<32x128xf32, #tpu.memory_space<vmem>>, vector<32x128xf32>
    tpu.vector_store %arg5[%c0_5, %c0_6], %5 {strides = array<i32>} : memref<32x128xf32, #tpu.memory_space<vmem>>, vector<32x128xf32>,
    return
  }
  func.func @transform_0(%arg0: i32, %arg1: i32) -> (i32, i32) {
    %c0_i32 = arith.constant 0 : i32
    %c0_i32_0 = arith.constant 0 : i32
    return %arg1, %c0_i32 : i32, i32
  }
  func.func @transform_1(%arg0: i32, %arg1: i32) -> (i32, i32) {
    %c0_i32 = arith.constant 0 : i32
    %c0_i32_0 = arith.constant 0 : i32
    return %c0_i32, %arg0 : i32, i32
  }
  func.func @transform_2(%arg0: i32, %arg1: i32) -> (i32, i32) {
    %c0_i32 = arith.constant 0 : i32
    %c0_i32_0 = arith.constant 0 : i32
    return %c0_i32, %arg0 : i32, i32
  }
  func.func @transform_3(%arg0: i32, %arg1: i32) -> (i32, i32) {
    %c0_i32 = arith.constant 0 : i32
    return %arg1, %arg0 : i32, i32
  }
}

</mosaic_0001>

<llo_original>
// kernel: tpu_custom_call.1
$region0: #{tpu_custom_call.1}
  #allocation0 [shape = 'u32[]', space=smem, size = 0x4, offset = 0x4, fixed_abs, tag = 'smem constant byte address 0x4 - core index']
  #allocation1 [shape = 'u32[144,128]{1,0:T(1,128)}', space=vmem, size = 0x12000, scoped, tag = 'internal scratch']
  %s0 = inlined_call_operand.hbm [shape: f32[32,128], index: 0, kind: input, shape index: {}]
  %s1 = inlined_call_operand.hbm [shape: f32[128,128], index: 1, kind: input, shape index: {}]
  %s2 = inlined_call_operand.vmem [shape: f32[1,128], index: 2, kind: input, shape index: {}]
  %s3 = inlined_call_operand.hbm [shape: f32[32,128], index: 3, kind: output, shape index: {}]
  %s4 = sld [smem:[#allocation0]]
  $region30: #{tpu_custom_call.1} parent=0
    _
  %s6 = ssub.s32 1, %s4
  %s7 = scalar_select 0, %s6, %s4
  $region1: #{tpu_custom_call.1} parent=0
    #allocation2 [shape = 'u8[16384]{0}', space=vmem, size = 0x4000, scoped, tag = 'input window, operand 0, single buffered']
    #allocation3 [shape = 's32[1]{0}', space=sflag, size = 0x4, scoped, tag = 'scoped memory for tpu_custom_call.1']
    #allocation4 [shape = 's32[1]{0}', space=sflag, size = 0x4, scoped, tag = 'scoped memory for tpu_custom_call.1']
    #allocation5 [shape = 'u8[65536]{0}', space=vmem, size = 0x10000, scoped, tag = 'input window, operand 1, single buffered']
    #allocation6 [shape = 's32[1]{0}', space=sflag, size = 0x4, scoped, tag = 'scoped memory for tpu_custom_call.1']
    #allocation7 [shape = 'u8[16384]{0}', space=vmem, size = 0x4000, scoped, tag = 'output window, operand 0, single buffered']
    %8 = vsyncpa [#allocation3], 0
    %9 = vsyncpa [#allocation6], 0
    %10 = vsyncpa [#allocation4], 0
    // Predicated region
    $region2: #{tpu_custom_call.1} parent=1 // pred_check
      _
    $region3: #{tpu_custom_call.1} parent=1 // pred_check_branch
      %12 = sbr.rel (0) target = $region5
    $region4: #{tpu_custom_call.1} parent=1 // pred_region
      %s14 = ssub.s32 512, 512
      %15 = vsyncadd [#allocation3], %s14
      %s16 = sshll.u32 [#allocation2], 4
      %s17 = int_to_ptr.vmem [resolvable:$true] %s16
      %22 = dma.hbm_to_vmem [thread:$0]  %s0, 512, %s17, [#allocation3], 128, 128, 8
    $region5: #{tpu_custom_call.1} parent=1 // pred_fallthru
      _
    // Predicated region
    $region6: #{tpu_custom_call.1} parent=1 // pred_check
      _
    $region7: #{tpu_custom_call.1} parent=1 // pred_check_branch
      %24 = sbr.rel (0) target = $region9
    $region8: #{tpu_custom_call.1} parent=1 // pred_region
      %s26 = ssub.s32 2048, 2048
      %27 = vsyncadd [#allocation6], %s26
      %s28 = sshll.u32 [#allocation5], 4
      %s29 = int_to_ptr.vmem [resolvable:$true] %s28
      %34 = dma.hbm_to_vmem [thread:$0]  %s1, 2048, %s29, [#allocation6], 128, 128, 8
    $region9: #{tpu_custom_call.1} parent=1 // pred_fallthru
      _
    // Predicated region
    $region10: #{tpu_custom_call.1} parent=1 // pred_check
      _
    $region11: #{tpu_custom_call.1} parent=1 // pred_check_branch
      %36 = sbr.rel (0) target = $region13
    $region12: #{tpu_custom_call.1} parent=1 // pred_region
      _
    $region13: #{tpu_custom_call.1} parent=1 // pred_fallthru
      _
    // Predicated region
    $region14: #{tpu_custom_call.1} parent=1 // pred_check
      _
    $region15: #{tpu_custom_call.1} parent=1 // pred_check_branch
      %38 = sbr.rel (0) target = $region17
    $region16: #{tpu_custom_call.1} parent=1 // pred_region
      %39 = dma.done [#allocation3], 512
    $region17: #{tpu_custom_call.1} parent=1 // pred_fallthru
      _
    // Predicated region
    $region18: #{tpu_custom_call.1} parent=1 // pred_check
      _
    $region19: #{tpu_custom_call.1} parent=1 // pred_check_branch
      %41 = sbr.rel (0) target = $region21
    $region20: #{tpu_custom_call.1} parent=1 // pred_region
      %42 = dma.done [#allocation6], 2048
    $region21: #{tpu_custom_call.1} parent=1 // pred_fallthru
      _
    %v43 = vld [vmem:[#allocation2] sm:$0xff]
    %v44 = vld [vmem:[#allocation2 + $0x8] sm:$0xff]
    %v45 = vld [vmem:[#allocation2 + $0x10] sm:$0xff]
    %v46 = vld [vmem:[#allocation2 + $0x18] sm:$0xff]
    %v47 = vld [vmem:[#allocation5] sm:$0xff]
    %v48 = vld [vmem:[#allocation5 + $0x8] sm:$0xff]
    %v49 = vld [vmem:[#allocation5 + $0x10] sm:$0xff]
    %v50 = vld [vmem:[#allocation5 + $0x18] sm:$0xff]
    %v51 = vld [vmem:[#allocation5 + $0x20] sm:$0xff]
    %v52 = vld [vmem:[#allocation5 + $0x28] sm:$0xff]
    %v53 = vld [vmem:[#allocation5 + $0x30] sm:$0xff]
    %v54 = vld [vmem:[#allocation5 + $0x38] sm:$0xff]
    %v55 = vld [vmem:[#allocation5 + $0x40] sm:$0xff]
    %v56 = vld [vmem:[#allocation5 + $0x48] sm:$0xff]
    %v57 = vld [vmem:[#allocation5 + $0x50] sm:$0xff]
    %v58 = vld [vmem:[#allocation5 + $0x58] sm:$0xff]
    %v59 = vld [vmem:[#allocation5 + $0x60] sm:$0xff]
    %v60 = vld [vmem:[#allocation5 + $0x68] sm:$0xff]
    %v61 = vld [vmem:[#allocation5 + $0x70] sm:$0xff]
    %v62 = vld [vmem:[#allocation5 + $0x78] sm:$0xff]
    %v63 = vld [vmem:[%s2] sm:$0x1]
    %v65 = vlaneseq
    %v66 = vshrl.u32 %v65, 7
    %v67 = vsub.s32 0, %v66
    %v68 = vrot.slane %v63, %v67
    %70 = vmatprep.subr.mxu0 0.0
    %71 = vmatpush1.msra.mxu0 %v47
    %72 = vmatprep.subr.mxu0 0.0
    %73 = vmatpush1.msra.mxu0 %v48
    %74 = vmatprep.subr.mxu0 0.0
    %75 = vmatpush1.msra.mxu0 %v49
    %76 = vmatprep.subr.mxu0 0.0
    %77 = vmatpush1.msra.mxu0 %v50
    %78 = vmatprep.subr.mxu0 0.0
    %79 = vmatpush1.msra.mxu0 %v51
    %80 = vmatprep.subr.mxu0 0.0
    %81 = vmatpush1.msra.mxu0 %v52
    %82 = vmatprep.subr.mxu0 0.0
    %83 = vmatpush1.msra.mxu0 %v53
    %84 = vmatprep.subr.mxu0 0.0
    %85 = vmatpush1.msra.mxu0 %v54
    %86 = vmatprep.subr.mxu0 0.0
    %87 = vmatpush1.msra.mxu0 %v55
    %88 = vmatprep.subr.mxu0 0.0
    %89 = vmatpush1.msra.mxu0 %v56
    %90 = vmatprep.subr.mxu0 0.0
    %91 = vmatpush1.msra.mxu0 %v57
    %92 = vmatprep.subr.mxu0 0.0
    %93 = vmatpush1.msra.mxu0 %v58
    %94 = vmatprep.subr.mxu0 0.0
    %95 = vmatpush1.msra.mxu0 %v59
    %96 = vmatprep.subr.mxu0 0.0
    %97 = vmatpush1.msra.mxu0 %v60
    %98 = vmatprep.subr.mxu0 0.0
    %99 = vmatpush1.msra.mxu0 %v61
    %100 = vmatprep.subr.mxu0 0.0
    %101 = vmatpush1.msra.mxu0 %v62
    %102 = vmatprep.subr.mxu0 0.0
    %103 = vmatpush1.msra.mxu0 0.0
    %104 = vmatprep.subr.mxu0 0.0
    %105 = vmatpush1.msra.mxu0 0.0
    %106 = vmatprep.subr.mxu0 0.0
    %107 = vmatpush1.msra.mxu0 0.0
    %108 = vmatprep.subr.mxu0 0.0
    %109 = vmatpush1.msra.mxu0 0.0
    %110 = vmatprep.subr.mxu0 0.0
    %111 = vmatpush1.msra.mxu0 0.0
    %112 = vmatprep.subr.mxu0 0.0
    %113 = vmatpush1.msra.mxu0 0.0
    %114 = vmatprep.subr.mxu0 0.0
    %115 = vmatpush1.msra.mxu0 0.0
    %116 = vmatprep.subr.mxu0 0.0
    %117 = vmatpush1.msra.mxu0 0.0
    %118 = vmatprep.subr.mxu0 0.0
    %119 = vmatpush1.msra.mxu0 0.0
    %120 = vmatprep.subr.mxu0 0.0
    %121 = vmatpush1.msra.mxu0 0.0
    %122 = vmatprep.subr.mxu0 0.0
    %123 = vmatpush1.msra.mxu0 0.0
    %124 = vmatprep.subr.mxu0 0.0
    %125 = vmatpush1.msra.mxu0 0.0
    %126 = vmatprep.subr.mxu0 0.0
    %127 = vmatpush1.msra.mxu0 0.0
    %128 = vmatprep.subr.mxu0 0.0
    %129 = vmatpush1.msra.mxu0 0.0
    %130 = vmatprep.subr.mxu0 0.0
    %131 = vmatpush1.msra.mxu0 0.0
    %132 = vmatprep.subr.mxu0 0.0
    %133 = vmatpush1.msra.mxu0 0.0
    %134 = vmatprep.mubr.f32.mxu0 0.0
    %135 = vmatmul.mubr.f32.gmra.mrb[0].mxu0 %v43
    %v136 = vpop.f32.mrb[0].mxu0
    %v137 = vadd.f32 %v68, %v136
    %v138 = vpop.f32.mrb[0].mxu0
    %139 = vmatprep.mubr.f32.mxu0 0.0
    %140 = vmatmul.mubr.f32.gmra.mrb[0].mxu0 %v44
    %v141 = vpop.f32.mrb[0].mxu0
    %v142 = vadd.f32 %v68, %v141
    %v143 = vpop.f32.mrb[0].mxu0
    %144 = vmatprep.mubr.f32.mxu0 0.0
    %145 = vmatmul.mubr.f32.gmra.mrb[0].mxu0 %v45
    %v146 = vpop.f32.mrb[0].mxu0
    %v147 = vadd.f32 %v68, %v146
    %v148 = vpop.f32.mrb[0].mxu0
    %149 = vmatprep.mubr.f32.mxu0 0.0
    %150 = vmatmul.mubr.f32.gmra.mrb[0].mxu0 %v46
    %v151 = vpop.f32.mrb[0].mxu0
    %v152 = vadd.f32 %v68, %v151
    %v153 = vpop.f32.mrb[0].mxu0
    %154 = vdwg.mxu0
    %155 = vst [vmem:[#allocation7] sm:$0xff] %v137
    %156 = vst [vmem:[#allocation7 + $0x8] sm:$0xff] %v142
    %157 = vst [vmem:[#allocation7 + $0x10] sm:$0xff] %v147
    %158 = vst [vmem:[#allocation7 + $0x18] sm:$0xff] %v152
    // Predicated region
    $region22: #{tpu_custom_call.1} parent=1 // pred_check
      _
    $region23: #{tpu_custom_call.1} parent=1 // pred_check_branch
      %160 = sbr.rel (0) target = $region25
    $region24: #{tpu_custom_call.1} parent=1 // pred_region
      %s162 = ssub.s32 512, 512
      %163 = vsyncadd [#allocation4], %s162
      %s164 = sshll.u32 [#allocation7], 4
      %s165 = int_to_ptr.vmem [resolvable:$true] %s164
      %170 = dma.vmem_to_hbm [thread:$0]  %s165, 512, %s3, [#allocation4], 128, 128, 8
    $region25: #{tpu_custom_call.1} parent=1 // pred_fallthru
      _
    // Predicated region
    $region26: #{tpu_custom_call.1} parent=1 // pred_check
      _
    $region27: #{tpu_custom_call.1} parent=1 // pred_check_branch
      %172 = sbr.rel (0) target = $region29
    $region28: #{tpu_custom_call.1} parent=1 // pred_region
      %173 = dma.done [#allocation4], 512
    $region29: #{tpu_custom_call.1} parent=1 // pred_fallthru
      _
    %174 = vsyncpa [#allocation3], 1
    %175 = vsyncpa [#allocation6], 1
    %176 = vsyncpa [#allocation4], 1

</llo_original>
